<compile_context>
chip_gen: v6e
topology: v6e:2x2x1
jax: 0.10.0
libtpu: 0.0.40
codegen_flags: <defaults>
</compile_context>

<pallas_src>
import jax
import jax.numpy as jnp
from jax.experimental import pallas as pl
from jax.experimental.pallas import tpu as pltpu


def write_unit_kernel(
    retrieved_ref,   # [TB, dim]
    memories_ref,    # [M, TB, dim]   (M = T-1)
    controls_ref,    # [T, TB, dim]
    wc_ref,          # [2*dim, dim]   concat linear weight
    wm_ref,          # [dim, dim]     mem    linear weight
    rows_ref,        # [4, dim]       rows: 0=bc, 1=bm, 2=wa, 3=wg (as row)
    bg_ref,          # [1, 1] SMEM    gate bias (true scalar)
    out_ref,         # [TB, dim]
    cat_ref,         # [TB, 2*dim]    VMEM scratch for the concat
):
    M = memories_ref.shape[0]
    T = controls_ref.shape[0]
    dim = out_ref.shape[1]
    f32 = jnp.float32

    retrieved = retrieved_ref[...].astype(f32)
    prev_mem = memories_ref[M - 1].astype(f32)

    # ---- concat = Linear(2*dim -> dim)([retrieved | prev_mem]) -------------
    # Stage the concatenation in VMEM scratch so the MXU sees one K=2*dim dot
    # instead of two K=dim dots + an extra VPU add.
    cat_ref[:, :dim] = retrieved
    cat_ref[:, dim:] = prev_mem
    bc = rows_ref[0:1, :].astype(f32)                         # [1, dim]
    concat = (
        jnp.dot(cat_ref[...], wc_ref[...].astype(f32),
                preferred_element_type=jnp.float32)
        + bc
    )                                                          # [TB, dim]

    # ---- self-attention branch ----------------------------------------------
    ctrl_last = controls_ref[T - 1].astype(f32)                # [TB, dim]
    wa = rows_ref[2:3, :].astype(f32)                          # [1, dim]
    w_ctrl = ctrl_last * wa                                    # fold weight once
    ctrl_prev = controls_ref[pl.ds(0, T - 1)].astype(f32)      # [T-1, TB, dim]
    # Linear(dim -> 1) == weighted lane reduction.  The attn bias `ba` is
    # dropped: softmax is invariant to a uniform shift of the logits.
    logits = jnp.sum(ctrl_prev * w_ctrl[None, :, :], axis=-1,
                     keepdims=True)                            # [T-1, TB, 1]

    lmax = jnp.max(logits, axis=0, keepdims=True)
    e = jnp.exp(logits - lmax)
    denom = jnp.sum(e, axis=0, keepdims=True)
    attn = e * pl.reciprocal(denom, approx=False)              # [T-1, TB, 1]

    mems = memories_ref[...].astype(f32)                       # [T-1, TB, dim]
    attn_mem = jnp.sum(attn * mems, axis=0)                    # [TB, dim]

    bm = rows_ref[1:2, :].astype(f32)                          # [1, dim]
    next_mem = (
        jnp.dot(attn_mem, wm_ref[...].astype(f32),
                preferred_element_type=jnp.float32)
        + bm
        + concat
    )                                                          # [TB, dim]

    # ---- memory-gate branch --------------------------------------------------
    # Linear(dim -> 1) as a weighted lane reduction (no N=1 MXU matmul).
    wg_row = rows_ref[3:4, :].astype(f32)                      # [1, dim]
    gate_logit = jnp.sum(ctrl_last * wg_row, axis=-1,
                         keepdims=True) + bg_ref[0, 0]         # [TB, 1]
    gate = jax.nn.sigmoid(gate_logit)
    out_ref[...] = (gate * prev_mem + (1.0 - gate) * next_mem).astype(out_ref.dtype)


def write_unit(retrieved, memories, controls, params, *, batch_tile=None):
    """params = (wc, bc, wa, ba, wm, bm, wg, bg), exactly like the torch module.

    `ba` is accepted but never sent to the kernel (softmax shift-invariance).
    """
    wc, bc, wa, ba, wm, bm, wg, bg = params
    del ba  # mathematically a no-op for the softmax
    B, dim = retrieved.shape
    M = memories.shape[0]
    T = controls.shape[0]
    assert M == T - 1, "MAC convention: len(memories) == len(controls) - 1"

    # Pack the four per-feature rows into ONE [4, dim] array -> one DMA.
    rows = jnp.stack([bc[0], bm[0], wa[0], wg[:, 0]], axis=0)  # [4, dim]
    bg_smem = jnp.asarray(bg, jnp.float32).reshape(1, 1)

    if batch_tile is None:
        batch_tile = min(B, 256)
    tb = batch_tile
    assert tb == B or tb % 8 == 0, "batch tile must be a multiple of 8 (or == B)"
    grid = (pl.cdiv(B, tb),)

    tile_b2 = lambda i: (i, 0)
    tile_b3 = lambda i: (0, i, 0)
    whole = lambda i: (0, 0)

    in_specs = [
        pl.BlockSpec((tb, dim), tile_b2),                    # retrieved
        pl.BlockSpec((M, tb, dim), tile_b3),                 # memories
        pl.BlockSpec((T, tb, dim), tile_b3),                 # controls
        pl.BlockSpec((2 * dim, dim), whole),                 # wc
        pl.BlockSpec((dim, dim), whole),                     # wm
        pl.BlockSpec((4, dim), whole),                       # bc/bm/wa/wg rows
        pl.BlockSpec(memory_space=pltpu.MemorySpace.SMEM),   # bg scalar
    ]
    out_specs = pl.BlockSpec((tb, dim), tile_b2)

    # VMEM budget: double-buffered blocks + scratch, with headroom.  Keep the
    # limit well under v7x's 64 MiB per TensorCore.
    itemsize = 4
    block_bytes = itemsize * (
        tb * dim                       # retrieved
        + (M + T) * tb * dim           # memories + controls
        + 3 * dim * dim                # wc + wm
        + 4 * dim                      # packed rows
        + tb * dim                     # out
    )
    scratch_bytes = 4 * tb * 2 * dim
    vmem_limit = int(max(16 * 2**20, min(3 * block_bytes + scratch_bytes,
                                         48 * 2**20)))

    return pl.pallas_call(
        write_unit_kernel,
        out_shape=jax.ShapeDtypeStruct((B, dim), retrieved.dtype),
        grid_spec=pltpu.PrefetchScalarGridSpec(
            num_scalar_prefetch=0,
            grid=grid,
            in_specs=in_specs,
            out_specs=out_specs,
            scratch_shapes=[pltpu.VMEM((tb, 2 * dim), jnp.float32)],
        ),
        compiler_params=pltpu.CompilerParams(
            dimension_semantics=("parallel",),
            vmem_limit_bytes=vmem_limit,
        ),
    )(retrieved, memories, controls, wc, wm, rows, bg_smem)


def write_unit_ref(retrieved, memories, controls, params):
    """Pure-JAX reference mirroring the PyTorch forward exactly (incl. ba)."""
    wc, bc, wa, ba, wm, bm, wg, bg = params
    prev_mem = memories[-1]
    concat = jnp.concatenate([retrieved, prev_mem], axis=1) @ wc + bc
    ctrl_last = controls[-1]
    prod = controls[:-1] * ctrl_last[None]                      # [T-1, B, dim]
    logits = jnp.einsum("tbd,d->tb", prod, wa[0]) + ba[0, 0]    # [T-1, B]
    attn = jax.nn.softmax(logits, axis=0)                       # over steps
    attn_mem = jnp.sum(attn[:, :, None] * memories, axis=0)     # [B, dim]
    next_mem = attn_mem @ wm + bm + concat
    gate = jax.nn.sigmoid(ctrl_last @ wg + bg)                  # [B, 1]
    return gate * prev_mem + (1.0 - gate) * next_mem


def init_params(key, dim):
    """Deterministic synthetic parameters (shapes from the module __init__)."""
    ks = jax.random.split(key, 8)
    scale2d = 1.0 / jnp.sqrt(2.0 * dim)
    scale1d = 1.0 / jnp.sqrt(1.0 * dim)
    wc = jax.random.normal(ks[0], (2 * dim, dim), jnp.float32) * scale2d  # Linear(2d, d)
    bc = jax.random.normal(ks[1], (1, dim), jnp.float32) * 0.01
    wa = jax.random.normal(ks[2], (1, dim), jnp.float32) * scale1d        # Linear(d, 1) (row)
    ba = jax.random.normal(ks[3], (1, 1), jnp.float32) * 0.01
    wm = jax.random.normal(ks[4], (dim, dim), jnp.float32) * scale1d      # Linear(d, d)
    bm = jax.random.normal(ks[5], (1, dim), jnp.float32) * 0.01
    wg = jax.random.normal(ks[6], (dim, 1), jnp.float32) * scale1d        # Linear(d, 1)
    bg = jax.random.normal(ks[7], (1, 1), jnp.float32) * 0.01
    return (wc, bc, wa, ba, wm, bm, wg, bg)


if __name__ == "__main__":
    key = jax.random.PRNGKey(0)
    B, dim = 16, 128     # lane-dense feature axis (dim multiple of 128)
    M = 4                # number of memories so far
    T = M + 1            # controls has one extra step (MAC convention)

    k_ret, k_mem, k_ctl, k_par = jax.random.split(key, 4)
    retrieved = jax.random.normal(k_ret, (B, dim), jnp.float32)
    memories = jax.random.normal(k_mem, (M, B, dim), jnp.float32)
    controls = jax.random.normal(k_ctl, (T, B, dim), jnp.float32)
    params = init_params(k_par, dim)

    out = write_unit(retrieved, memories, controls, params, batch_tile=8)
    out = jax.block_until_ready(out)

    ref = write_unit_ref(retrieved, memories, controls, params)
    assert out.shape == (B, dim) and out.dtype == jnp.float32
    err = float(jnp.max(jnp.abs(out - ref)))
    assert err < 1e-4, f"mismatch vs JAX reference: max abs err = {err}"

    print("KERNEL_OK")
</pallas_src>

<mosaic_0001>
module attributes {stable_mosaic.version = 11 : i64} {
  func.func @write_unit_kernel(%arg0: i32, %arg1: memref<8x128xf32, #tpu.memory_space<vmem>>, %arg2: memref<4x8x128xf32, #tpu.memory_space<vmem>>, %arg3: memref<5x8x128xf32, #tpu.memory_space<vmem>>, %arg4: memref<256x128xf32, #tpu.memory_space<vmem>>, %arg5: memref<128x128xf32, #tpu.memory_space<vmem>>, %arg6: memref<4x128xf32, #tpu.memory_space<vmem>>, %arg7: memref<1x1xf32, #tpu.memory_space<smem>>, %arg8: memref<8x128xf32, #tpu.memory_space<vmem>>, %arg9: memref<8x256xf32, #tpu.memory_space<vmem>>) attributes {dimension_semantics = [#tpu.dimension_semantics<parallel>], iteration_bounds = array<i64: 2>, scalar_prefetch = 0 : i64, scratch_operands = 1 : i64, tpu.core_type = #tpu.core_type<tc>, window_params = [{transform_indices = @transform_0, window_bounds = array<i64: 8, 128>}, {transform_indices = @transform_1, window_bounds = array<i64: 4, 8, 128>}, {transform_indices = @transform_2, window_bounds = array<i64: 5, 8, 128>}, {pipeline_mode = #tpu.pipeline_mode<synchronous>, transform_indices = @transform_3, window_bounds = array<i64: 256, 128>}, {pipeline_mode = #tpu.pipeline_mode<synchronous>, transform_indices = @transform_4, window_bounds = array<i64: 128, 128>}, {pipeline_mode = #tpu.pipeline_mode<synchronous>, transform_indices = @transform_5, window_bounds = array<i64: 4, 128>}, {transform_indices = @transform_6, window_bounds = array<i64: 1, 1>}, {transform_indices = @transform_7, window_bounds = array<i64: 8, 128>}]} {
    %c0 = arith.constant 0 : index
    %c0_0 = arith.constant 0 : index
    %0 = vector.load %arg1[%c0, %c0_0] : memref<8x128xf32, #tpu.memory_space<vmem>>, vector<8x128xf32>
    %c3 = arith.constant 3 : index
    %c0_1 = arith.constant 0 : index
    %c0_2 = arith.constant 0 : index
    %1 = vector.load %arg2[%c3, %c0_1, %c0_2] : memref<4x8x128xf32, #tpu.memory_space<vmem>>, vector<1x8x128xf32>
    %2 = vector.shape_cast %1 : vector<1x8x128xf32> to vector<8x128xf32>
    %c0_3 = arith.constant 0 : index
    %c0_4 = arith.constant 0 : index
    %3 = vector.load %arg9[%c0_3, %c0_4] : memref<8x256xf32, #tpu.memory_space<vmem>>, vector<8x128xf32>
    tpu.vector_store %arg9[%c0_3, %c0_4], %0 {strides = array<i32>} : memref<8x256xf32, #tpu.memory_space<vmem>>, vector<8x128xf32>,
    %c0_5 = arith.constant 0 : index
    %c128 = arith.constant 128 : index
    %4 = vector.load %arg9[%c0_5, %c128] : memref<8x256xf32, #tpu.memory_space<vmem>>, vector<8x128xf32>
    tpu.vector_store %arg9[%c0_5, %c128], %2 {strides = array<i32>} : memref<8x256xf32, #tpu.memory_space<vmem>>, vector<8x128xf32>,
    %c0_6 = arith.constant 0 : index
    %c0_7 = arith.constant 0 : index
    %5 = vector.load %arg6[%c0_6, %c0_7] : memref<4x128xf32, #tpu.memory_space<vmem>>, vector<1x128xf32>
    %c0_8 = arith.constant 0 : index
    %c0_9 = arith.constant 0 : index
    %6 = vector.load %arg9[%c0_8, %c0_9] : memref<8x256xf32, #tpu.memory_space<vmem>>, vector<8x256xf32>
    %c0_10 = arith.constant 0 : index
    %c0_11 = arith.constant 0 : index
    %7 = vector.load %arg4[%c0_10, %c0_11] : memref<256x128xf32, #tpu.memory_space<vmem>>, vector<256x128xf32>
    %cst = arith.constant dense<0.000000e+00> : vector<8x128xf32>
    %8 = tpu.matmul %6, %7, %cst {dimension_numbers = #tpu.dot_dimension_numbers<[1], [0], [0], [1], [0, 0, 1, 1], [], []>} : vector<8x256xf32>, vector<256x128xf32>, vector<8x128xf32> -> vector<8x128xf32>
    %9 = vector.broadcast %5 : vector<1x128xf32> to vector<8x128xf32>
    %10 = arith.addf %8, %9 : vector<8x128xf32>
    %c4 = arith.constant 4 : index
    %c0_12 = arith.constant 0 : index
    %c0_13 = arith.constant 0 : index
    %11 = vector.load %arg3[%c4, %c0_12, %c0_13] : memref<5x8x128xf32, #tpu.memory_space<vmem>>, vector<1x8x128xf32>
    %12 = vector.shape_cast %11 : vector<1x8x128xf32> to vector<8x128xf32>
    %c2 = arith.constant 2 : index
    %c0_14 = arith.constant 0 : index
    %13 = vector.load %arg6[%c2, %c0_14] : memref<4x128xf32, #tpu.memory_space<vmem>>, vector<1x128xf32>
    %14 = vector.broadcast %13 : vector<1x128xf32> to vector<8x128xf32>
    %15 = arith.mulf %12, %14 : vector<8x128xf32>
    %c0_15 = arith.constant 0 : index
    %c0_16 = arith.constant 0 : index
    %c0_17 = arith.constant 0 : index
    %16 = vector.load %arg3[%c0_15, %c0_16, %c0_17] : memref<5x8x128xf32, #tpu.memory_space<vmem>>, vector<4x8x128xf32>
    %17 = vector.shape_cast %15 : vector<8x128xf32> to vector<1x8x128xf32>
    %18 = vector.broadcast %17 : vector<1x8x128xf32> to vector<4x8x128xf32>
    %19 = arith.mulf %16, %18 : vector<4x8x128xf32>
    %cst_18 = arith.constant dense<0.000000e+00> : vector<4x8xf32>
    %20 = vector.multi_reduction <add>, %19, %cst_18 [2] : vector<4x8x128xf32> to vector<4x8xf32>
    %21 = vector.shape_cast %20 : vector<4x8xf32> to vector<4x8x1xf32>
    %cst_19 = arith.constant dense<0xFF800000> : vector<8x1xf32>
    %22 = vector.multi_reduction <maximumf>, %21, %cst_19 [0] : vector<4x8x1xf32> to vector<8x1xf32>
    %23 = vector.shape_cast %22 : vector<8x1xf32> to vector<1x8x1xf32>
    %24 = vector.broadcast %23 : vector<1x8x1xf32> to vector<4x8x1xf32>
    %25 = arith.subf %21, %24 : vector<4x8x1xf32>
    %26 = math.exp %25 : vector<4x8x1xf32>
    %cst_20 = arith.constant dense<0.000000e+00> : vector<8x1xf32>
    %27 = vector.multi_reduction <add>, %26, %cst_20 [0] : vector<4x8x1xf32> to vector<8x1xf32>
    %28 = vector.shape_cast %27 : vector<8x1xf32> to vector<1x8x1xf32>
    %29 = tpu.reciprocal %28 : vector<1x8x1xf32> -> vector<1x8x1xf32>
    %30 = vector.broadcast %29 : vector<1x8x1xf32> to vector<4x8x1xf32>
    %31 = arith.mulf %26, %30 : vector<4x8x1xf32>
    %c0_21 = arith.constant 0 : index
    %c0_22 = arith.constant 0 : index
    %c0_23 = arith.constant 0 : index
    %32 = vector.load %arg2[%c0_21, %c0_22, %c0_23] : memref<4x8x128xf32, #tpu.memory_space<vmem>>, vector<4x8x128xf32>
    %33 = vector.broadcast %31 : vector<4x8x1xf32> to vector<4x8x128xf32>
    %34 = arith.mulf %33, %32 : vector<4x8x128xf32>
    %cst_24 = arith.constant dense<0.000000e+00> : vector<8x128xf32>
    %35 = vector.multi_reduction <add>, %34, %cst_24 [0] : vector<4x8x128xf32> to vector<8x128xf32>
    %c1 = arith.constant 1 : index
    %c0_25 = arith.constant 0 : index
    %36 = vector.load %arg6[%c1, %c0_25] : memref<4x128xf32, #tpu.memory_space<vmem>>, vector<1x128xf32>
    %c0_26 = arith.constant 0 : index
    %c0_27 = arith.constant 0 : index
    %37 = vector.load %arg5[%c0_26, %c0_27] : memref<128x128xf32, #tpu.memory_space<vmem>>, vector<128x128xf32>
    %cst_28 = arith.constant dense<0.000000e+00> : vector<8x128xf32>
    %38 = tpu.matmul %35, %37, %cst_28 {dimension_numbers = #tpu.dot_dimension_numbers<[1], [0], [0], [1], [0, 0, 1, 1], [], []>} : vector<8x128xf32>, vector<128x128xf32>, vector<8x128xf32> -> vector<8x128xf32>
    %39 = vector.broadcast %36 : vector<1x128xf32> to vector<8x128xf32>
    %40 = arith.addf %38, %39 : vector<8x128xf32>
    %41 = arith.addf %40, %10 : vector<8x128xf32>
    %c3_29 = arith.constant 3 : index
    %c0_30 = arith.constant 0 : index
    %42 = vector.load %arg6[%c3_29, %c0_30] : memref<4x128xf32, #tpu.memory_space<vmem>>, vector<1x128xf32>
    %43 = vector.broadcast %42 : vector<1x128xf32> to vector<8x128xf32>
    %44 = arith.mulf %12, %43 : vector<8x128xf32>
    %cst_31 = arith.constant dense<0.000000e+00> : vector<8xf32>
    %45 = vector.multi_reduction <add>, %44, %cst_31 [1] : vector<8x128xf32> to vector<8xf32>
    %46 = vector.shape_cast %45 : vector<8xf32> to vector<8x1xf32>
    %c0_32 = arith.constant 0 : index
    %c0_33 = arith.constant 0 : index
    %47 = memref.load %arg7[%c0_32, %c0_33] : memref<1x1xf32, #tpu.memory_space<smem>>
    %48 = vector.broadcast %47 : f32 to vector<8x1xf32>
    %49 = arith.addf %46, %48 : vector<8x1xf32>
    %50 = arith.negf %49 : vector<8x1xf32>
    %51 = math.exp %50 : vector<8x1xf32>
    %cst_34 = arith.constant 1.000000e+00 : f32
    %52 = vector.broadcast %cst_34 : f32 to vector<8x1xf32>
    %53 = arith.addf %52, %51 : vector<8x1xf32>
    %54 = arith.divf %52, %53 : vector<8x1xf32>
    %55 = vector.broadcast %54 : vector<8x1xf32> to vector<8x128xf32>
    %56 = arith.mulf %55, %2 : vector<8x128xf32>
    %cst_35 = arith.constant 1.000000e+00 : f32
    %57 = vector.broadcast %cst_35 : f32 to vector<8x1xf32>
    %58 = arith.subf %57, %54 : vector<8x1xf32>
    %59 = vector.broadcast %58 : vector<8x1xf32> to vector<8x128xf32>
    %60 = arith.mulf %59, %41 : vector<8x128xf32>
    %61 = arith.addf %56, %60 : vector<8x128xf32>
    %c0_36 = arith.constant 0 : index
    %c0_37 = arith.constant 0 : index
    %62 = vector.load %arg8[%c0_36, %c0_37] : memref<8x128xf32, #tpu.memory_space<vmem>>, vector<8x128xf32>
    tpu.vector_store %arg8[%c0_36, %c0_37], %61 {strides = array<i32>} : memref<8x128xf32, #tpu.memory_space<vmem>>, vector<8x128xf32>,
    return
  }
  func.func @transform_0(%arg0: i32) -> (i32, i32) {
    %c0_i32 = arith.constant 0 : i32
    %c0_i32_0 = arith.constant 0 : i32
    return %arg0, %c0_i32 : i32, i32
  }
  func.func @transform_1(%arg0: i32) -> (i32, i32, i32) {
    %c0_i32 = arith.constant 0 : i32
    %c0_i32_0 = arith.constant 0 : i32
    %c0_i32_1 = arith.constant 0 : i32
    return %c0_i32, %arg0, %c0_i32_0 : i32, i32, i32
  }
  func.func @transform_2(%arg0: i32) -> (i32, i32, i32) {
    %c0_i32 = arith.constant 0 : i32
    %c0_i32_0 = arith.constant 0 : i32
    %c0_i32_1 = arith.constant 0 : i32
    return %c0_i32, %arg0, %c0_i32_0 : i32, i32, i32
  }
  func.func @transform_3(%arg0: i32) -> (i32, i32) {
    %c0_i32 = arith.constant 0 : i32
    %c0_i32_0 = arith.constant 0 : i32
    %c0_i32_1 = arith.constant 0 : i32
    return %c0_i32, %c0_i32_0 : i32, i32
  }
  func.func @transform_4(%arg0: i32) -> (i32, i32) {
    %c0_i32 = arith.constant 0 : i32
    %c0_i32_0 = arith.constant 0 : i32
    %c0_i32_1 = arith.constant 0 : i32
    return %c0_i32, %c0_i32_0 : i32, i32
  }
  func.func @transform_5(%arg0: i32) -> (i32, i32) {
    %c0_i32 = arith.constant 0 : i32
    %c0_i32_0 = arith.constant 0 : i32
    %c0_i32_1 = arith.constant 0 : i32
    return %c0_i32, %c0_i32_0 : i32, i32
  }
  func.func @transform_6(%arg0: i32) -> (i32, i32) {
    %c0_i32 = arith.constant 0 : i32
    %c0_i32_0 = arith.constant 0 : i32
    %c0_i32_1 = arith.constant 0 : i32
    return %c0_i32, %c0_i32_0 : i32, i32
  }
  func.func @transform_7(%arg0: i32) -> (i32, i32) {
    %c0_i32 = arith.constant 0 : i32
    %c0_i32_0 = arith.constant 0 : i32
    return %arg0, %c0_i32 : i32, i32
  }
}

</mosaic_0001>

<llo_original>
// kernel: tpu_custom_call.1
$region0: #{tpu_custom_call.1}
  #allocation0 [shape = 'u32[]', space=smem, size = 0x4, offset = 0x4, fixed_abs, tag = 'smem constant byte address 0x4 - core index']
  #allocation1 [shape = 'u32[144,128]{1,0:T(1,128)}', space=vmem, size = 0x12000, scoped, tag = 'internal scratch']
  #allocation2 [shape = 'f32[8,256]{1,0:T(8,128)}', space=vmem, size = 0x2000, scoped, tag = 'scratch operand']
  #allocation3 [shape = 'f32[1,1]{1,0:T(1,128)S(6)}', space=smem, size = 0x200, scoped, tag = 'scoped memory for tpu_custom_call.1']
  %s0 = inlined_call_operand.hbm [shape: f32[16,128], index: 0, kind: input, shape index: {}]
  %s1 = inlined_call_operand.hbm [shape: f32[4,16,128], index: 1, kind: input, shape index: {}]
  %s2 = inlined_call_operand.hbm [shape: f32[5,16,128], index: 2, kind: input, shape index: {}]
  %s3 = inlined_call_operand.hbm [shape: f32[256,128], index: 3, kind: input, shape index: {}]
  %s4 = inlined_call_operand.hbm [shape: f32[128,128], index: 4, kind: input, shape index: {}]
  %s5 = inlined_call_operand.vmem [shape: f32[4,128], index: 5, kind: input, shape index: {}]
  %s6 = inlined_call_operand.<no memory space> [shape: f32[1,1], index: 6, kind: input, shape index: {}]
  %s7 = inlined_call_operand.hbm [shape: f32[16,128], index: 7, kind: output, shape index: {}]
  %s8 = sld [smem:[#allocation0]]
  $region81: #{tpu_custom_call.1} parent=0
    _
  %s10 = ssub.s32 1, %s8
  %s11 = scalar_select 0, %s10, %s8
  %12 = sst [smem:[#allocation3]] %s6
  $region1: #{tpu_custom_call.1} parent=0
    #allocation4 [shape = 'u8[8192]{0}', space=vmem, size = 0x2000, scoped, tag = 'input window, operand 0']
    #allocation5 [shape = 's32[2]{0}', space=sflag, size = 0x8, scoped, tag = 'scoped memory for tpu_custom_call.1']
    #allocation6 [shape = 's32[2]{0}', space=sflag, size = 0x8, scoped, tag = 'scoped memory for tpu_custom_call.1']
    #allocation7 [shape = 'u8[32768]{0}', space=vmem, size = 0x8000, scoped, tag = 'input window, operand 1']
    #allocation8 [shape = 's32[2]{0}', space=sflag, size = 0x8, scoped, tag = 'scoped memory for tpu_custom_call.1']
    #allocation9 [shape = 'u8[40960]{0}', space=vmem, size = 0xa000, scoped, tag = 'input window, operand 2']
    #allocation10 [shape = 'u8[131072]{0}', space=vmem, size = 0x20000, scoped, tag = 'input window, operand 3, single buffered']
    #allocation11 [shape = 's32[1]{0}', space=sflag, size = 0x4, scoped, tag = 'scoped memory for tpu_custom_call.1']
    #allocation12 [shape = 'u8[65536]{0}', space=vmem, size = 0x10000, scoped, tag = 'input window, operand 4, single buffered']
    #allocation13 [shape = 'u8[8192]{0}', space=vmem, size = 0x2000, scoped, tag = 'output window, operand 0']
    %13 = vsyncpa [#allocation5], 0
    %s14 = scalar_lea.sflag [#allocation5], 1
    %15 = vsyncpa %s14, 0
    %16 = vsyncpa [#allocation8], 0
    %s17 = scalar_lea.sflag [#allocation8], 1
    %18 = vsyncpa %s17, 0
    %19 = vsyncpa [#allocation11], 0
    %20 = vsyncpa [#allocation6], 0
    %s21 = scalar_lea.sflag [#allocation6], 1
    %22 = vsyncpa %s21, 0
    loop: start=0, step=1, limit=4
    $region2: #{tpu_custom_call.1} parent=1 // loop_pre_header
      _
    $region3: #{tpu_custom_call.1} parent=1 // loop_header
      %s24 = sphi 0, %s28
      %p25 = scmp.ge.s32.totalorder %s24, 4
      %s34 = sphi 0, %s36
      %s37 = sphi 0, %s34
      %s38 = sphi 0, %s37
      %s54 = sphi 0, %s38
      %s60 = sphi 0, %s62
      %s63 = sphi 0, %s60
      %s64 = sphi 0, %s63
      %s80 = sphi 0, %s64
      %s86 = sphi 0, %s88
      %s89 = sphi 0, %s86
      %s90 = sphi 0, %s89
      %s106 = sphi 0, %s90
      %s110 = sphi 0, %s110
      %s112 = sphi 0, %s110
      %s113 = sphi 0, %s112
      %s127 = sphi 0, %s113
      %s131 = sphi 0, %s131
      %s133 = sphi 0, %s131
      %s134 = sphi 0, %s133
      %s148 = sphi 0, %s134
      %s152 = sphi 0, %s152
      %s154 = sphi 0, %s152
      %s155 = sphi 0, %s154
      %s169 = sphi 0, %s155
      %s173 = sphi 0, %s173
      %s175 = sphi 0, %s173
      %s176 = sphi 0, %s175
      %s190 = sphi 0, %s176
      %s196 = sphi 0, %s198
      %s199 = sphi 0, %s196
      %s200 = sphi 0, %s199
      %s216 = sphi 0, %s200
    $region4: #{tpu_custom_call.1} parent=1 // loop_header_branch
      %27 = sbr.rel (%p25) target = $region8
    $region5: #{tpu_custom_call.1} parent=1 // loop_body
      %s29 = ssub.s32 %s24, 1
      %s30 = ssub.s32 %s24, 2
      %s31 = sadd.s32 %s24, 1
      %s32 = ssub.s32 %s24, %s31
      %p33 = scmp.eq.s32.totalorder %s32, 0
      %s35 = sadd.s32 %s34, 1
      %s36 = scalar_select %p33, %s34, %s35
      %p39 = pneg %p33
      %p40 = scmp.eq.s32.totalorder %s24, 1
      %p41 = por %p39, %p40
      %p42 = scmp.ne.s32.totalorder %s34, %s37
      %p43 = scmp.eq.s32.totalorder %s24, 0
      %p44 = por %p42, %p43
      %p45 = scmp.ne.s32.totalorder %s34, %s37
      %p46 = scmp.eq.s32.totalorder %s29, 1
      %p47 = por %p45, %p46
      %p48 = scmp.ne.s32.totalorder %s37, %s38
      %p49 = scmp.eq.s32.totalorder %s29, 0
      %p50 = por %p48, %p49
      %p51 = scmp.ne.s32.totalorder %s37, %s38
      %p52 = scmp.eq.s32.totalorder %s30, 1
      %p53 = por %p51, %p52
      %p55 = scmp.ne.s32.totalorder %s38, %s54
      %p56 = scmp.eq.s32.totalorder %s30, 0
      %p57 = por %p55, %p56
      %s58 = ssub.s32 %s24, %s31
      %p59 = scmp.eq.s32.totalorder %s58, 0
      %s61 = sadd.s32 %s60, 1
      %s62 = scalar_select %p59, %s60, %s61
      %p65 = pneg %p59
      %p66 = scmp.eq.s32.totalorder %s24, 1
      %p67 = por %p65, %p66
      %p68 = scmp.ne.s32.totalorder %s60, %s63
      %p69 = scmp.eq.s32.totalorder %s24, 0
      %p70 = por %p68, %p69
      %p71 = scmp.ne.s32.totalorder %s60, %s63
      %p72 = scmp.eq.s32.totalorder %s29, 1
      %p73 = por %p71, %p72
      %p74 = scmp.ne.s32.totalorder %s63, %s64
      %p75 = scmp.eq.s32.totalorder %s29, 0
      %p76 = por %p74, %p75
      %p77 = scmp.ne.s32.totalorder %s63, %s64
      %p78 = scmp.eq.s32.totalorder %s30, 1
      %p79 = por %p77, %p78
      %p81 = scmp.ne.s32.totalorder %s64, %s80
      %p82 = scmp.eq.s32.totalorder %s30, 0
      %p83 = por %p81, %p82
      %s84 = ssub.s32 %s24, %s31
      %p85 = scmp.eq.s32.totalorder %s84, 0
      %s87 = sadd.s32 %s86, 1
      %s88 = scalar_select %p85, %s86, %s87
      %p91 = pneg %p85
      %p92 = scmp.eq.s32.totalorder %s24, 1
      %p93 = por %p91, %p92
      %p94 = scmp.ne.s32.totalorder %s86, %s89
      %p95 = scmp.eq.s32.totalorder %s24, 0
      %p96 = por %p94, %p95
      %p97 = scmp.ne.s32.totalorder %s86, %s89
      %p98 = scmp.eq.s32.totalorder %s29, 1
      %p99 = por %p97, %p98
      %p100 = scmp.ne.s32.totalorder %s89, %s90
      %p101 = scmp.eq.s32.totalorder %s29, 0
      %p102 = por %p100, %p101
      %p103 = scmp.ne.s32.totalorder %s89, %s90
      %p104 = scmp.eq.s32.totalorder %s30, 1
      %p105 = por %p103, %p104
      %p107 = scmp.ne.s32.totalorder %s90, %s106
      %p108 = scmp.eq.s32.totalorder %s30, 0
      %p109 = por %p107, %p108
      %s111 = sadd.s32 %s110, 1
      %p114 = scmp.eq.s32.totalorder %s24, 1
      %p115 = scmp.ne.s32.totalorder %s110, %s112
      %p116 = scmp.eq.s32.totalorder %s24, 0
      %p117 = por %p115, %p116
      %p118 = scmp.ne.s32.totalorder %s110, %s112
      %p119 = scmp.eq.s32.totalorder %s29, 1
      %p120 = por %p118, %p119
      %p121 = scmp.ne.s32.totalorder %s112, %s113
      %p122 = scmp.eq.s32.totalorder %s29, 0
      %p123 = por %p121, %p122
      %p124 = scmp.ne.s32.totalorder %s112, %s113
      %p125 = scmp.eq.s32.totalorder %s30, 1
      %p126 = por %p124, %p125
      %p128 = scmp.ne.s32.totalorder %s113, %s127
      %p129 = scmp.eq.s32.totalorder %s30, 0
      %p130 = por %p128, %p129
      %s132 = sadd.s32 %s131, 1
      %p135 = scmp.eq.s32.totalorder %s24, 1
      %p136 = scmp.ne.s32.totalorder %s131, %s133
      %p137 = scmp.eq.s32.totalorder %s24, 0
      %p138 = por %p136, %p137
      %p139 = scmp.ne.s32.totalorder %s131, %s133
      %p140 = scmp.eq.s32.totalorder %s29, 1
      %p141 = por %p139, %p140
      %p142 = scmp.ne.s32.totalorder %s133, %s134
      %p143 = scmp.eq.s32.totalorder %s29, 0
      %p144 = por %p142, %p143
      %p145 = scmp.ne.s32.totalorder %s133, %s134
      %p146 = scmp.eq.s32.totalorder %s30, 1
      %p147 = por %p145, %p146
      %p149 = scmp.ne.s32.totalorder %s134, %s148
      %p150 = scmp.eq.s32.totalorder %s30, 0
      %p151 = por %p149, %p150
      %s153 = sadd.s32 %s152, 1
      %p156 = scmp.eq.s32.totalorder %s24, 1
      %p157 = scmp.ne.s32.totalorder %s152, %s154
      %p158 = scmp.eq.s32.totalorder %s24, 0
      %p159 = por %p157, %p158
      %p160 = scmp.ne.s32.totalorder %s152, %s154
      %p161 = scmp.eq.s32.totalorder %s29, 1
      %p162 = por %p160, %p161
      %p163 = scmp.ne.s32.totalorder %s154, %s155
      %p164 = scmp.eq.s32.totalorder %s29, 0
      %p165 = por %p163, %p164
      %p166 = scmp.ne.s32.totalorder %s154, %s155
      %p167 = scmp.eq.s32.totalorder %s30, 1
      %p168 = por %p166, %p167
      %p170 = scmp.ne.s32.totalorder %s155, %s169
      %p171 = scmp.eq.s32.totalorder %s30, 0
      %p172 = por %p170, %p171
      %s174 = sadd.s32 %s173, 1
      %p177 = scmp.eq.s32.totalorder %s24, 1
      %p178 = scmp.ne.s32.totalorder %s173, %s175
      %p179 = scmp.eq.s32.totalorder %s24, 0
      %p180 = por %p178, %p179
      %p181 = scmp.ne.s32.totalorder %s173, %s175
      %p182 = scmp.eq.s32.totalorder %s29, 1
      %p183 = por %p181, %p182
      %p184 = scmp.ne.s32.totalorder %s175, %s176
      %p185 = scmp.eq.s32.totalorder %s29, 0
      %p186 = por %p184, %p185
      %p187 = scmp.ne.s32.totalorder %s175, %s176
      %p188 = scmp.eq.s32.totalorder %s30, 1
      %p189 = por %p187, %p188
      %p191 = scmp.ne.s32.totalorder %s176, %s190
      %p192 = scmp.eq.s32.totalorder %s30, 0
      %p193 = por %p191, %p192
      %s194 = ssub.s32 %s24, %s31
      %p195 = scmp.eq.s32.totalorder %s194, 0
      %s197 = sadd.s32 %s196, 1
      %s198 = scalar_select %p195, %s196, %s197
      %p201 = pneg %p195
      %p202 = scmp.eq.s32.totalorder %s24, 1
      %p203 = por %p201, %p202
      %p204 = scmp.ne.s32.totalorder %s196, %s199
      %p205 = scmp.eq.s32.totalorder %s24, 0
      %p206 = por %p204, %p205
      %p207 = scmp.ne.s32.totalorder %s196, %s199
      %p208 = scmp.eq.s32.totalorder %s29, 1
      %p209 = por %p207, %p208
      %p210 = scmp.ne.s32.totalorder %s199, %s200
      %p211 = scmp.eq.s32.totalorder %s29, 0
      %p212 = por %p210, %p211
      %p213 = scmp.ne.s32.totalorder %s199, %s200
      %p214 = scmp.eq.s32.totalorder %s30, 1
      %p215 = por %p213, %p214
      %p217 = scmp.ne.s32.totalorder %s200, %s216
      %p218 = scmp.eq.s32.totalorder %s30, 0
      %p219 = por %p217, %p218
      %p220 = scmp.le.s32.totalorder 1, %s24
      %p221 = scmp.lt.s32.totalorder %s24, 3
      %p222 = pnand %p220, %p221
      %p223 = pneg %p222
      // Predicated region
      $region9: #{tpu_custom_call.1} parent=5 // pred_check
        _
      $region10: #{tpu_custom_call.1} parent=5 // pred_check_branch
        %225 = sbr.rel (%p222) target = $region12
      $region11: #{tpu_custom_call.1} parent=5 // pred_region
        %s226 = ssub.s32 %s24, 1
        // Predicated region
        $region13: #{tpu_custom_call.1} parent=11 // pred_check
          %p227 = pneg %p123
        $region14: #{tpu_custom_call.1} parent=11 // pred_check_branch
          %229 = sbr.rel (%p227) target = $region16
        $region15: #{tpu_custom_call.1} parent=11 // pred_region
          %s231 = ssub.s32 4096, 4096
          %232 = vsyncadd [#allocation11], %s231
          %s233 = sshll.u32 [#allocation10], 4
          %s234 = int_to_ptr.vmem [resolvable:$true] %s233
          %239 = dma.hbm_to_vmem [thread:$0]  %s3, 4096, %s234, [#allocation11], 128, 128, 8
        $region16: #{tpu_custom_call.1} parent=11 // pred_fallthru
          _
        // Predicated region
        $region17: #{tpu_custom_call.1} parent=11 // pred_check
          %p240 = pneg %p144
        $region18: #{tpu_custom_call.1} parent=11 // pred_check_branch
          %242 = sbr.rel (%p240) target = $region20
        $region19: #{tpu_custom_call.1} parent=11 // pred_region
          %s244 = ssub.s32 2048, 2048
          %245 = vsyncadd [#allocation11], %s244
          %s246 = sshll.u32 [#allocation12], 4
          %s247 = int_to_ptr.vmem [resolvable:$true] %s246
          %252 = dma.hbm_to_vmem [thread:$0]  %s4, 2048, %s247, [#allocation11], 128, 128, 8
        $region20: #{tpu_custom_call.1} parent=11 // pred_fallthru
          _
        // Predicated region
        $region21: #{tpu_custom_call.1} parent=11 // pred_check
          %p253 = pneg %p165
        $region22: #{tpu_custom_call.1} parent=11 // pred_check_branch
          %255 = sbr.rel (%p253) target = $region24
        $region23: #{tpu_custom_call.1} parent=11 // pred_region
          _
        $region24: #{tpu_custom_call.1} parent=11 // pred_fallthru
          _
        // Predicated region
        $region25: #{tpu_custom_call.1} parent=11 // pred_check
          %p256 = pneg %p186
        $region26: #{tpu_custom_call.1} parent=11 // pred_check_branch
          %258 = sbr.rel (%p256) target = $region28
        $region27: #{tpu_custom_call.1} parent=11 // pred_region
          _
        $region28: #{tpu_custom_call.1} parent=11 // pred_fallthru
          _
      $region12: #{tpu_custom_call.1} parent=5 // pred_fallthru
        _
      %p259 = scmp.lt.s32.totalorder %s24, 2
      // Predicated region
      $region29: #{tpu_custom_call.1} parent=5 // pred_check
        %p260 = pneg %p259
      $region30: #{tpu_custom_call.1} parent=5 // pred_check_branch
        %262 = sbr.rel (%p260) target = $region32
      $region31: #{tpu_custom_call.1} parent=5 // pred_region
        // Predicated region
        $region33: #{tpu_custom_call.1} parent=31 // pred_check
          %p263 = pneg %p44
        $region34: #{tpu_custom_call.1} parent=31 // pred_check_branch
          %265 = sbr.rel (%p263) target = $region36
        $region35: #{tpu_custom_call.1} parent=31 // pred_region
          %s266 = sand.u32 %s34, 1
          %s267 = scalar_lea.sflag [#allocation5], %s266
          %s268 = sand.u32 %s34, 1
          %s269 = smul.addr %s268, 8
          %s270 = scalar_lea.vmem [#allocation4], %s269
          %s272 = ssub.s32 128, 128
          %273 = vsyncadd %s267, %s272
          %s274 = smul.addr %s24, 128
          %s275 = scalar_lea.hbm %s0, %s274
          %s277 = sshll.u32 %s270, 4
          %s278 = int_to_ptr.vmem [resolvable:$true] %s277
          %280 = dma.hbm_to_vmem [thread:$0]  %s275, 128, %s278, %s267
        $region36: #{tpu_custom_call.1} parent=31 // pred_fallthru
          _
        // Predicated region
        $region37: #{tpu_custom_call.1} parent=31 // pred_check
          %p281 = pneg %p70
        $region38: #{tpu_custom_call.1} parent=31 // pred_check_branch
          %283 = sbr.rel (%p281) target = $region40
        $region39: #{tpu_custom_call.1} parent=31 // pred_region
          %s284 = sand.u32 %s24, 1
          %s285 = scalar_lea.sflag [#allocation8], %s284
          %s286 = sand.u32 %s60, 1
          %s287 = smul.addr %s286, 32
          %s288 = scalar_lea.vmem [#allocation7], %s287
          %s290 = ssub.s32 512, 512
          %291 = vsyncadd %s285, %s290
          %s292 = smul.addr %s24, 128
          %s293 = scalar_lea.hbm %s1, %s292
          %s294 = sshll.u32 %s288, 4
          %s295 = int_to_ptr.vmem [resolvable:$true] %s294
          %300 = dma.hbm_to_vmem [thread:$0]  %s293, 512, %s295, %s285, 256, 128, 8
        $region40: #{tpu_custom_call.1} parent=31 // pred_fallthru
          _
        // Predicated region
        $region41: #{tpu_custom_call.1} parent=31 // pred_check
          %p301 = pneg %p96
        $region42: #{tpu_custom_call.1} parent=31 // pred_check_branch
          %303 = sbr.rel (%p301) target = $region44
        $region43: #{tpu_custom_call.1} parent=31 // pred_region
          %s304 = sand.u32 %s24, 1
          %s305 = scalar_lea.sflag [#allocation8], %s304
          %s306 = sand.u32 %s86, 1
          %s307 = smul.addr %s306, 40
          %s308 = scalar_lea.vmem [#allocation9], %s307
          %s310 = ssub.s32 640, 640
          %311 = vsyncadd %s305, %s310
          %s312 = smul.addr %s24, 128
          %s313 = scalar_lea.hbm %s2, %s312
          %s314 = sshll.u32 %s308, 4
          %s315 = int_to_ptr.vmem [resolvable:$true] %s314
          %320 = dma.hbm_to_vmem [thread:$0]  %s313, 640, %s315, %s305, 256, 128, 8
        $region44: #{tpu_custom_call.1} parent=31 // pred_fallthru
          _
      $region32: #{tpu_custom_call.1} parent=5 // pred_fallthru
        _
      %p321 = scmp.le.s32.totalorder 1, %s24
      %p322 = scmp.lt.s32.totalorder %s24, 3
      %p323 = pnand %p321, %p322
      %p324 = pneg %p323
      // Predicated region
      $region45: #{tpu_custom_call.1} parent=5 // pred_check
        _
      $region46: #{tpu_custom_call.1} parent=5 // pred_check_branch
        %326 = sbr.rel (%p323) target = $region48
      $region47: #{tpu_custom_call.1} parent=5 // pred_region
        %s327 = ssub.s32 %s24, 1
        %s328 = sand.u32 %s37, 1
        %s329 = scalar_lea.sflag [#allocation5], %s328
        %s330 = sand.u32 %s37, 1
        %s331 = smul.addr %s330, 8
        %s332 = scalar_lea.vmem [#allocation4], %s331
        // Predicated region
        $region49: #{tpu_custom_call.1} parent=47 // pred_check
          %p333 = pneg %p50
        $region50: #{tpu_custom_call.1} parent=47 // pred_check_branch
          %335 = sbr.rel (%p333) target = $region52
        $region51: #{tpu_custom_call.1} parent=47 // pred_region
          %336 = dma.done %s329, 128
        $region52: #{tpu_custom_call.1} parent=47 // pred_fallthru
          _
        %s337 = sand.u32 %s29, 1
        %s338 = scalar_lea.sflag [#allocation8], %s337
        %s339 = sand.u32 %s63, 1
        %s340 = smul.addr %s339, 32
        %s341 = scalar_lea.vmem [#allocation7], %s340
        // Predicated region
        $region53: #{tpu_custom_call.1} parent=47 // pred_check
          %p342 = pneg %p76
        $region54: #{tpu_custom_call.1} parent=47 // pred_check_branch
          %344 = sbr.rel (%p342) target = $region56
        $region55: #{tpu_custom_call.1} parent=47 // pred_region
          %345 = dma.done %s338, 512
        $region56: #{tpu_custom_call.1} parent=47 // pred_fallthru
          _
        %s346 = sand.u32 %s29, 1
        %s347 = scalar_lea.sflag [#allocation8], %s346
        %s348 = sand.u32 %s89, 1
        %s349 = smul.addr %s348, 40
        %s350 = scalar_lea.vmem [#allocation9], %s349
        // Predicated region
        $region57: #{tpu_custom_call.1} parent=47 // pred_check
          %p351 = pneg %p102
        $region58: #{tpu_custom_call.1} parent=47 // pred_check_branch
          %353 = sbr.rel (%p351) target = $region60
        $region59: #{tpu_custom_call.1} parent=47 // pred_region
          %354 = dma.done %s347, 640
        $region60: #{tpu_custom_call.1} parent=47 // pred_fallthru
          _
        // Predicated region
        $region61: #{tpu_custom_call.1} parent=47 // pred_check
          %p355 = pneg %p123
        $region62: #{tpu_custom_call.1} parent=47 // pred_check_branch
          %357 = sbr.rel (%p355) target = $region64
        $region63: #{tpu_custom_call.1} parent=47 // pred_region
          %358 = dma.done [#allocation11], 4096
        $region64: #{tpu_custom_call.1} parent=47 // pred_fallthru
          _
        // Predicated region
        $region65: #{tpu_custom_call.1} parent=47 // pred_check
          %p359 = pneg %p144
        $region66: #{tpu_custom_call.1} parent=47 // pred_check_branch
          %361 = sbr.rel (%p359) target = $region68
        $region67: #{tpu_custom_call.1} parent=47 // pred_region
          %362 = dma.done [#allocation11], 2048
        $region68: #{tpu_custom_call.1} parent=47 // pred_fallthru
          _
        %s363 = sand.u32 %s37, 1
        %s364 = scalar_lea.sflag [#allocation5], %s363
        %s365 = sand.u32 %s37, 1
        %s366 = smul.addr %s365, 8
        %s367 = scalar_lea.vmem [#allocation4], %s366
        %p368 = pneg %p50
        %p369 = pneg %p47
        %s370 = sand.u32 %s29, 1
        %s371 = scalar_lea.sflag [#allocation8], %s370
        %s372 = sand.u32 %s63, 1
        %s373 = smul.addr %s372, 32
        %s374 = scalar_lea.vmem [#allocation7], %s373
        %p375 = pneg %p76
        %p376 = pneg %p73
        %s377 = sand.u32 %s29, 1
        %s378 = scalar_lea.sflag [#allocation8], %s377
        %s379 = sand.u32 %s89, 1
        %s380 = smul.addr %s379, 40
        %s381 = scalar_lea.vmem [#allocation9], %s380
        %p382 = pneg %p102
        %p383 = pneg %p99
        %p384 = pneg %p123
        %p385 = pneg %p120
        %p386 = pneg %p144
        %p387 = pneg %p141
        %p388 = pneg %p165
        %p389 = pneg %p162
        %p390 = pneg %p186
        %p391 = pneg %p183
        %p392 = pneg %p212
        %p393 = pneg %p209
        %s394 = sand.u32 %s199, 1
        %s395 = scalar_lea.sflag [#allocation6], %s394
        %s396 = sand.u32 %s199, 1
        %s397 = smul.addr %s396, 8
        %s398 = scalar_lea.vmem [#allocation13], %s397
        %v399 = vld [vmem:[%s332] sm:$0xff]
        %s400 = scalar_lea.vmem %s341, 24 [#allocation7]
        %v401 = vld [vmem:[%s400] sm:$0xff]
        %402 = vst [vmem:[#allocation2] sm:$0xff] %v399
        %403 = vst [vmem:[#allocation2 + $0x8] sm:$0xff] %v401
        %v404 = vld [vmem:[%s5] sm:$0x1]
        %v405 = vld [vmem:[#allocation2] sm:$0xff]
        %v406 = vld [vmem:[#allocation2 + $0x8] sm:$0xff]
        %v407 = vld [vmem:[#allocation10] sm:$0xff]
        %v408 = vld [vmem:[#allocation10 + $0x8] sm:$0xff]
        %v409 = vld [vmem:[#allocation10 + $0x10] sm:$0xff]
        %v410 = vld [vmem:[#allocation10 + $0x18] sm:$0xff]
        %v411 = vld [vmem:[#allocation10 + $0x20] sm:$0xff]
        %v412 = vld [vmem:[#allocation10 + $0x28] sm:$0xff]
        %v413 = vld [vmem:[#allocation10 + $0x30] sm:$0xff]
        %v414 = vld [vmem:[#allocation10 + $0x38] sm:$0xff]
        %v415 = vld [vmem:[#allocation10 + $0x40] sm:$0xff]
        %v416 = vld [vmem:[#allocation10 + $0x48] sm:$0xff]
        %v417 = vld [vmem:[#allocation10 + $0x50] sm:$0xff]
        %v418 = vld [vmem:[#allocation10 + $0x58] sm:$0xff]
        %v419 = vld [vmem:[#allocation10 + $0x60] sm:$0xff]
        %v420 = vld [vmem:[#allocation10 + $0x68] sm:$0xff]
        %v421 = vld [vmem:[#allocation10 + $0x70] sm:$0xff]
        %v422 = vld [vmem:[#allocation10 + $0x78] sm:$0xff]
        %v423 = vld [vmem:[#allocation10 + $0x80] sm:$0xff]
        %v424 = vld [vmem:[#allocation10 + $0x88] sm:$0xff]
        %v425 = vld [vmem:[#allocation10 + $0x90] sm:$0xff]
        %v426 = vld [vmem:[#allocation10 + $0x98] sm:$0xff]
        %v427 = vld [vmem:[#allocation10 + $0xa0] sm:$0xff]
        %v428 = vld [vmem:[#allocation10 + $0xa8] sm:$0xff]
        %v429 = vld [vmem:[#allocation10 + $0xb0] sm:$0xff]
        %v430 = vld [vmem:[#allocation10 + $0xb8] sm:$0xff]
        %v431 = vld [vmem:[#allocation10 + $0xc0] sm:$0xff]
        %v432 = vld [vmem:[#allocation10 + $0xc8] sm:$0xff]
        %v433 = vld [vmem:[#allocation10 + $0xd0] sm:$0xff]
        %v434 = vld [vmem:[#allocation10 + $0xd8] sm:$0xff]
        %v435 = vld [vmem:[#allocation10 + $0xe0] sm:$0xff]
        %v436 = vld [vmem:[#allocation10 + $0xe8] sm:$0xff]
        %v437 = vld [vmem:[#allocation10 + $0xf0] sm:$0xff]
        %v438 = vld [vmem:[#allocation10 + $0xf8] sm:$0xff]
        %v439 = vlaneseq
        %v440 = vshrl.u32 %v439, 7
        %v441 = vsub.s32 0, %v440
        %v442 = vrot.slane %v404, %v441
        %443 = vmatprep.subr.mxu0 0.0
        %444 = vmatpush1.msra.mxu0 %v422
        %445 = vmatprep.subr.mxu0 0.0
        %446 = vmatpush1.msra.mxu0 %v421
        %447 = vmatprep.subr.mxu0 0.0
        %448 = vmatpush1.msra.mxu0 %v420
        %449 = vmatprep.subr.mxu0 0.0
        %450 = vmatpush1.msra.mxu0 %v419
        %451 = vmatprep.subr.mxu0 0.0
        %452 = vmatpush1.msra.mxu0 %v418
        %453 = vmatprep.subr.mxu0 0.0
        %454 = vmatpush1.msra.mxu0 %v417
        %455 = vmatprep.subr.mxu0 0.0
        %456 = vmatpush1.msra.mxu0 %v416
        %457 = vmatprep.subr.mxu0 0.0
        %458 = vmatpush1.msra.mxu0 %v415
        %459 = vmatprep.subr.mxu0 0.0
        %460 = vmatpush1.msra.mxu0 %v414
        %461 = vmatprep.subr.mxu0 0.0
        %462 = vmatpush1.msra.mxu0 %v413
        %463 = vmatprep.subr.mxu0 0.0
        %464 = vmatpush1.msra.mxu0 %v412
        %465 = vmatprep.subr.mxu0 0.0
        %466 = vmatpush1.msra.mxu0 %v411
        %467 = vmatprep.subr.mxu0 0.0
        %468 = vmatpush1.msra.mxu0 %v410
        %469 = vmatprep.subr.mxu0 0.0
        %470 = vmatpush1.msra.mxu0 %v409
        %471 = vmatprep.subr.mxu0 0.0
        %472 = vmatpush1.msra.mxu0 %v408
        %473 = vmatprep.subr.mxu0 0.0
        %474 = vmatpush1.msra.mxu0 %v407
        %475 = vmatprep.subr.mxu0 0.0
        %476 = vmatpush2.msra.mxu0 %v438
        %477 = vmatprep.subr.mxu0 0.0
        %478 = vmatpush2.msra.mxu0 %v437
        %479 = vmatprep.subr.mxu0 0.0
        %480 = vmatpush2.msra.mxu0 %v436
        %481 = vmatprep.subr.mxu0 0.0
        %482 = vmatpush2.msra.mxu0 %v435
        %483 = vmatprep.subr.mxu0 0.0
        %484 = vmatpush2.msra.mxu0 %v434
        %485 = vmatprep.subr.mxu0 0.0
        %486 = vmatpush2.msra.mxu0 %v433
        %487 = vmatprep.subr.mxu0 0.0
        %488 = vmatpush2.msra.mxu0 %v432
        %489 = vmatprep.subr.mxu0 0.0
        %490 = vmatpush2.msra.mxu0 %v431
        %491 = vmatprep.subr.mxu0 0.0
        %492 = vmatpush2.msra.mxu0 %v430
        %493 = vmatprep.subr.mxu0 0.0
        %494 = vmatpush2.msra.mxu0 %v429
        %495 = vmatprep.subr.mxu0 0.0
        %496 = vmatpush2.msra.mxu0 %v428
        %497 = vmatprep.subr.mxu0 0.0
        %498 = vmatpush2.msra.mxu0 %v427
        %499 = vmatprep.subr.mxu0 0.0
        %500 = vmatpush2.msra.mxu0 %v426
        %501 = vmatprep.subr.mxu0 0.0
        %502 = vmatpush2.msra.mxu0 %v425
        %503 = vmatprep.subr.mxu0 0.0
        %504 = vmatpush2.msra.mxu0 %v424
        %505 = vmatprep.subr.mxu0 0.0
        %506 = vmatpush2.msra.mxu0 %v423
        %507 = vmatprep.mubr.f32.mxu0 %v406
        %508 = vmatmul.mubr.f32.gmra.mxu0 %v405
        %v509 = vpop.f32.mrf.mxu0
        %v510 = vadd.f32 %v442, %v509
        %v511 = vpop.f32.mrf.mxu0
        %512 = vdwg.mxu0
        %s513 = scalar_lea.vmem %s350, 32 [#allocation9]
        %v514 = vld [vmem:[%s513] sm:$0xff]
        %v515 = vld [vmem:[%s5 + $0x2] sm:$0x1]
        %v516 = vlaneseq
        %v517 = vshrl.u32 %v516, 7
        %v518 = vsub.s32 0, %v517
        %v519 = vrot.slane %v515, %v518
        %v520 = vmul.f32 %v514, %v519
        %v521 = vld [vmem:[%s350] sm:$0xff]
        %v522 = vld [vmem:[%s350 + $0x8] sm:$0xff]
        %v523 = vld [vmem:[%s350 + $0x10] sm:$0xff]
        %v524 = vld [vmem:[%s350 + $0x18] sm:$0xff]
        %v525 = vmul.f32 %v521, %v520
        %v526 = vmul.f32 %v522, %v520
        %v527 = vmul.f32 %v523, %v520
        %v528 = vmul.f32 %v524, %v520
        %529 = vadd.xlane.f32.xlu0 %v525
        %v530 = vpop.xlane.xlu0 %529
        %531 = vadd.xlane.f32.xlu0 %v526
        %v532 = vpop.xlane.xlu0 %531
        %533 = vadd.xlane.f32.xlu0 %v527
        %v534 = vpop.xlane.xlu0 %533
        %535 = vadd.xlane.f32.xlu0 %v528
        %v536 = vpop.xlane.xlu0 %535
        %v537 = vmax.f32 %v530, %v532
        %v538 = vmax.f32 %v534, %v536
        %v539 = vmax.f32 %v537, %v538
        %v540 = vsub.f32 %v530, %v539
        %v541 = vsub.f32 %v532, %v539
        %v542 = vsub.f32 %v534, %v539
        %v543 = vsub.f32 %v536, %v539
        %v544 = vmul.f32 %v540, 1.442695
        %v545 = vpow.pop %v544
        %v546 = vmul.f32 %v541, 1.442695
        %v547 = vpow.pop %v546
        %v548 = vmul.f32 %v542, 1.442695
        %v549 = vpow.pop %v548
        %v550 = vmul.f32 %v543, 1.442695
        %v551 = vpow.pop %v550
        %v552 = vadd.f32 %v545, %v547
        %v553 = vadd.f32 %v552, %v549
        %v554 = vadd.f32 %v553, %v551
        %v555 = vrcp.pop %v554
        %v556 = vmul.f32 %v545, %v555
        %v557 = vmul.f32 %v547, %v555
        %v558 = vmul.f32 %v549, %v555
        %v559 = vmul.f32 %v551, %v555
        %v560 = vld [vmem:[%s341] sm:$0xff]
        %v561 = vld [vmem:[%s341 + $0x8] sm:$0xff]
        %v562 = vld [vmem:[%s341 + $0x10] sm:$0xff]
        %v563 = vld [vmem:[%s341 + $0x18] sm:$0xff]
        %v564 = vmul.f32 %v556, %v560
        %v565 = vmul.f32 %v557, %v561
        %v566 = vmul.f32 %v558, %v562
        %v567 = vmul.f32 %v559, %v563
        %v568 = vadd.f32 %v564, %v565
        %v569 = vadd.f32 %v568, %v566
        %v570 = vadd.f32 %v569, %v567
        %v571 = vld [vmem:[%s5 + $0x1] sm:$0x1]
        %v572 = vld [vmem:[#allocation12] sm:$0xff]
        %v573 = vld [vmem:[#allocation12 + $0x8] sm:$0xff]
        %v574 = vld [vmem:[#allocation12 + $0x10] sm:$0xff]
        %v575 = vld [vmem:[#allocation12 + $0x18] sm:$0xff]
        %v576 = vld [vmem:[#allocation12 + $0x20] sm:$0xff]
        %v577 = vld [vmem:[#allocation12 + $0x28] sm:$0xff]
        %v578 = vld [vmem:[#allocation12 + $0x30] sm:$0xff]
        %v579 = vld [vmem:[#allocation12 + $0x38] sm:$0xff]
        %v580 = vld [vmem:[#allocation12 + $0x40] sm:$0xff]
        %v581 = vld [vmem:[#allocation12 + $0x48] sm:$0xff]
        %v582 = vld [vmem:[#allocation12 + $0x50] sm:$0xff]
        %v583 = vld [vmem:[#allocation12 + $0x58] sm:$0xff]
        %v584 = vld [vmem:[#allocation12 + $0x60] sm:$0xff]
        %v585 = vld [vmem:[#allocation12 + $0x68] sm:$0xff]
        %v586 = vld [vmem:[#allocation12 + $0x70] sm:$0xff]
        %v587 = vld [vmem:[#allocation12 + $0x78] sm:$0xff]
        %v588 = vlaneseq
        %v589 = vshrl.u32 %v588, 7
        %v590 = vsub.s32 0, %v589
        %v591 = vrot.slane %v571, %v590
        %592 = vmatprep.subr.mxu0 0.0
        %593 = vmatpush1.msra.mxu0 %v587
        %594 = vmatprep.subr.mxu0 0.0
        %595 = vmatpush1.msra.mxu0 %v586
        %596 = vmatprep.subr.mxu0 0.0
        %597 = vmatpush1.msra.mxu0 %v585
        %598 = vmatprep.subr.mxu0 0.0
        %599 = vmatpush1.msra.mxu0 %v584
        %600 = vmatprep.subr.mxu0 0.0
        %601 = vmatpush1.msra.mxu0 %v583
        %602 = vmatprep.subr.mxu0 0.0
        %603 = vmatpush1.msra.mxu0 %v582
        %604 = vmatprep.subr.mxu0 0.0
        %605 = vmatpush1.msra.mxu0 %v581
        %606 = vmatprep.subr.mxu0 0.0
        %607 = vmatpush1.msra.mxu0 %v580
        %608 = vmatprep.subr.mxu0 0.0
        %609 = vmatpush1.msra.mxu0 %v579
        %610 = vmatprep.subr.mxu0 0.0
        %611 = vmatpush1.msra.mxu0 %v578
        %612 = vmatprep.subr.mxu0 0.0
        %613 = vmatpush1.msra.mxu0 %v577
        %614 = vmatprep.subr.mxu0 0.0
        %615 = vmatpush1.msra.mxu0 %v576
        %616 = vmatprep.subr.mxu0 0.0
        %617 = vmatpush1.msra.mxu0 %v575
        %618 = vmatprep.subr.mxu0 0.0
        %619 = vmatpush1.msra.mxu0 %v574
        %620 = vmatprep.subr.mxu0 0.0
        %621 = vmatpush1.msra.mxu0 %v573
        %622 = vmatprep.subr.mxu0 0.0
        %623 = vmatpush1.msra.mxu0 %v572
        %624 = vmatprep.subr.mxu0 0.0
        %625 = vmatpush2.msra.mxu0 0.0
        %626 = vmatprep.subr.mxu0 0.0
        %627 = vmatpush2.msra.mxu0 0.0
        %628 = vmatprep.subr.mxu0 0.0
        %629 = vmatpush2.msra.mxu0 0.0
        %630 = vmatprep.subr.mxu0 0.0
        %631 = vmatpush2.msra.mxu0 0.0
        %632 = vmatprep.subr.mxu0 0.0
        %633 = vmatpush2.msra.mxu0 0.0
        %634 = vmatprep.subr.mxu0 0.0
        %635 = vmatpush2.msra.mxu0 0.0
        %636 = vmatprep.subr.mxu0 0.0
        %637 = vmatpush2.msra.mxu0 0.0
        %638 = vmatprep.subr.mxu0 0.0
        %639 = vmatpush2.msra.mxu0 0.0
        %640 = vmatprep.subr.mxu0 0.0
        %641 = vmatpush2.msra.mxu0 0.0
        %642 = vmatprep.subr.mxu0 0.0
        %643 = vmatpush2.msra.mxu0 0.0
        %644 = vmatprep.subr.mxu0 0.0
        %645 = vmatpush2.msra.mxu0 0.0
        %646 = vmatprep.subr.mxu0 0.0
        %647 = vmatpush2.msra.mxu0 0.0
        %648 = vmatprep.subr.mxu0 0.0
        %649 = vmatpush2.msra.mxu0 0.0
        %650 = vmatprep.subr.mxu0 0.0
        %651 = vmatpush2.msra.mxu0 0.0
        %652 = vmatprep.subr.mxu0 0.0
        %653 = vmatpush2.msra.mxu0 0.0
        %654 = vmatprep.subr.mxu0 0.0
        %655 = vmatpush2.msra.mxu0 0.0
        %656 = vmatprep.mubr.f32.mxu0 0.0
        %657 = vmatmul.mubr.f32.gmra.mxu0 %v570
        %v658 = vpop.f32.mrf.mxu0
        %v659 = vadd.f32 %v591, %v658
        %v660 = vpop.f32.mrf.mxu0
        %661 = vdwg.mxu0
        %v662 = vadd.f32 %v659, %v510
        %v663 = vld [vmem:[%s5 + $0x3] sm:$0x1]
        %v664 = vlaneseq
        %v665 = vshrl.u32 %v664, 7
        %v666 = vsub.s32 0, %v665
        %v667 = vrot.slane %v663, %v666
        %v668 = vmul.f32 %v514, %v667
        %669 = vadd.xlane.f32.xlu0 %v668
        %v670 = vpop.xlane.xlu0 %669
        %s671 = sld [smem:[#allocation3]]
        %v672 = vstv %s671
        %v673 = vadd.f32 %v670, %v672
        %v674 = vxor.u32 %v673, 2147483648
        %v675 = vmul.f32 %v674, 1.442695
        %v676 = vpow.pop %v675
        %v677 = vadd.f32 %v676, 1.0
        %v678 = vrcp.pop %v677
        %v679 = vmul.f32 1.0, %v678
        %v680 = vmul.f32 %v679, %v401
        %v681 = vsub.f32 1.0, %v679
        %v682 = vmul.f32 %v681, %v662
        %v683 = vadd.f32 %v680, %v682
        %684 = vst [vmem:[%s398] sm:$0xff] %v683
        %s685 = sand.u32 %s199, 1
        %s686 = scalar_lea.sflag [#allocation6], %s685
        %s687 = sand.u32 %s199, 1
        %s688 = smul.addr %s687, 8
        %s689 = scalar_lea.vmem [#allocation13], %s688
        // Predicated region
        $region69: #{tpu_custom_call.1} parent=47 // pred_check
          %p690 = pneg %p209
        $region70: #{tpu_custom_call.1} parent=47 // pred_check_branch
          %692 = sbr.rel (%p690) target = $region72
        $region71: #{tpu_custom_call.1} parent=47 // pred_region
          %s694 = ssub.s32 128, 128
          %695 = vsyncadd %s686, %s694
          %s696 = smul.addr %s29, 128
          %s697 = scalar_lea.hbm %s7, %s696
          %s699 = sshll.u32 %s689, 4
          %s700 = int_to_ptr.vmem [resolvable:$true] %s699
          %702 = dma.vmem_to_hbm [thread:$0]  %s700, 128, %s697, %s686
        $region72: #{tpu_custom_call.1} parent=47 // pred_fallthru
          _
      $region48: #{tpu_custom_call.1} parent=5 // pred_fallthru
        _
      %p703 = scmp.le.s32.totalorder 2, %s24
      // Predicated region
      $region73: #{tpu_custom_call.1} parent=5 // pred_check
        %p704 = pneg %p703
      $region74: #{tpu_custom_call.1} parent=5 // pred_check_branch
        %706 = sbr.rel (%p704) target = $region76
      $region75: #{tpu_custom_call.1} parent=5 // pred_region
        %s707 = ssub.s32 %s24, 2
        // Predicated region
        $region77: #{tpu_custom_call.1} parent=75 // pred_check
          %p708 = pneg %p215
        $region78: #{tpu_custom_call.1} parent=75 // pred_check_branch
          %710 = sbr.rel (%p708) target = $region80
        $region79: #{tpu_custom_call.1} parent=75 // pred_region
          %s711 = sand.u32 %s200, 1
          %s712 = scalar_lea.sflag [#allocation6], %s711
          %s713 = sand.u32 %s200, 1
          %s714 = smul.addr %s713, 8
          %s715 = scalar_lea.vmem [#allocation13], %s714
          %716 = dma.done %s712, 128
        $region80: #{tpu_custom_call.1} parent=75 // pred_fallthru
          _
      $region76: #{tpu_custom_call.1} parent=5 // pred_fallthru
        _
    $region6: #{tpu_custom_call.1} parent=1 // loop_footer
      %s28 = sadd.s32 1, %s24
    $region7: #{tpu_custom_call.1} parent=1 // loop_footer_branch
      %23 = sbr.rel target = $region3
    $region8: #{tpu_custom_call.1} parent=1 // loop_exit
      _
    %717 = vsyncpa [#allocation5], 1
    %s718 = scalar_lea.sflag [#allocation5], 1
    %719 = vsyncpa %s718, 1
    %720 = vsyncpa [#allocation8], 1
    %s721 = scalar_lea.sflag [#allocation8], 1
    %722 = vsyncpa %s721, 1
    %723 = vsyncpa [#allocation11], 1
    %724 = vsyncpa [#allocation6], 1
    %s725 = scalar_lea.sflag [#allocation6], 1
    %726 = vsyncpa %s725, 1

</llo_original>
